<compile_context>
chip_gen: v6e
topology: v6e:2x2x1
jax: 0.10.0
libtpu: 0.0.40
codegen_flags: <defaults>
</compile_context>

<pallas_src>
import functools

import jax
import jax.numpy as jnp
from jax.experimental import pallas as pl
from jax.experimental.pallas import tpu as pltpu


def _round_up(x, m):
    return ((x + m - 1) // m) * m


def _nbytes(shape, dtype):
    n = 1
    for s in shape:
        n *= int(s)
    return n * jnp.dtype(dtype).itemsize


def _vmem_capacity_bytes():
    """Generation-aware VMEM capacity (v5e/v6e: 128 MiB; v7x: 64 MiB per TC)."""
    try:
        cap = int(pltpu.get_tpu_info().vmem_capacity_bytes)
        if cap > 0:
            return cap
    except Exception:
        pass
    return 64 << 20  # conservative: assume the smallest (v7x per-TC) VMEM


# ---------------------------------------------------------------------------
# Kernels
# ---------------------------------------------------------------------------

def _mlp_resident_kernel(x_ref, w1_ref, b1_ref, w2_ref, b2_ref, o_ref, *,
                         n_sub, hid_chunk, gelu_approx):
    """One (batch, token-tile) grid step with W1/W2 fully VMEM-resident.

    x_ref  : (1, C_in, T)    activation tile (channels x tokens), input dtype
    w1_ref : (HID_P, C_in)   full fc1.weight (bf16), resident across the grid
    b1_ref : (HID_P, 1)      full fc1.bias   (f32)
    w2_ref : (C_out, HID_P)  full fc2.weight (bf16), resident across the grid
    b2_ref : (C_out, 1)      fc2.bias        (f32)
    o_ref  : (1, C_out, T)   output tile
    """
    x = x_ref[0].astype(w1_ref.dtype)          # (C_in, T) bf16 for the MXU
    acc = None
    for j in range(n_sub):                     # static -> fully unrolled
        lo, hi = j * hid_chunk, (j + 1) * hid_chunk
        # fc1 chunk: (HID_C, C_in) @ (C_in, T) -> (HID_C, T), f32 accumulate.
        h = jnp.dot(w1_ref[lo:hi, :], x, preferred_element_type=jnp.float32)
        h += b1_ref[lo:hi, :]                  # lane broadcast, f32 on VPU
        # approximate=True -> tanh path on the EUP (separate VLIW slot);
        # ~1e-3 max abs deviation from PyTorch nn.GELU() exact erf.
        h = jax.nn.gelu(h, approximate=gelu_approx)
        # fc2 partial: (C_out, HID_C) @ (HID_C, T) -> (C_out, T), f32.
        p = jnp.dot(w2_ref[:, lo:hi], h.astype(w2_ref.dtype),
                    preferred_element_type=jnp.float32)
        acc = p if acc is None else acc + p
    o_ref[0] = (acc + b2_ref[...]).astype(o_ref.dtype)
    # Dropout with p=0.0 is the identity; nothing to do.
    # TODO(synk): if drop > 0.0 were required, build the mask in-kernel with
    # pltpu.prng_seed / pltpu.prng_random_bits.


def _mlp_ktiled_kernel(x_ref, w1_ref, b1_ref, w2_ref, b2_ref, o_ref, acc_ref,
                       *, gelu_approx):
    """Fallback when the weights don't fit VMEM: hidden axis tiled on the grid.

    acc_ref: (C_out, T) f32 accumulator, resident across the hidden grid axis.
    """
    k = pl.program_id(2)

    x = x_ref[0].astype(w1_ref.dtype)
    h = jnp.dot(w1_ref[...], x, preferred_element_type=jnp.float32)
    h += b1_ref[...]
    h = jax.nn.gelu(h, approximate=gelu_approx)
    p = jnp.dot(w2_ref[...], h.astype(w2_ref.dtype),
                preferred_element_type=jnp.float32)

    @pl.when(k == 0)
    def _():
        acc_ref[...] = p                       # overwrite: saves an acc RMW

    @pl.when(k != 0)
    def _():
        acc_ref[...] += p

    @pl.when(k == pl.num_programs(2) - 1)
    def _():
        o_ref[0] = (acc_ref[...] + b2_ref[...]).astype(o_ref.dtype)


# ---------------------------------------------------------------------------
# Wrappers
# ---------------------------------------------------------------------------

def prepare_params(params, *, hid_sub=512, compute_dtype=jnp.bfloat16):
    """One-time weight preparation (hoisted out of the forward pass).

    Pads the hidden dim, casts weights to bf16 and reshapes biases to column
    vectors so repeated forward calls don't re-read/re-write the full weight
    matrices in HBM on every step.  Zero-padding the hidden axis is safe
    because b1 is zero-padded, GELU(0) == 0 and W2's padded columns are zero.
    """
    w1, b1, w2, b2 = params["w1"], params["b1"], params["w2"], params["b2"]
    hid, _ = w1.shape                          # PyTorch fc1.weight: (hid, in)
    c_out = w2.shape[0]                        # PyTorch fc2.weight: (out, hid)
    hid_pad = _round_up(hid, hid_sub) if hid > hid_sub else _round_up(hid, 8)
    if hid_pad != hid:
        w1 = jnp.pad(w1, ((0, hid_pad - hid), (0, 0)))
        b1 = jnp.pad(b1, (0, hid_pad - hid))
        w2 = jnp.pad(w2, ((0, 0), (0, hid_pad - hid)))
    return {
        "w1": w1.astype(compute_dtype),
        "b1": b1.reshape(hid_pad, 1).astype(jnp.float32),
        "w2": w2.astype(compute_dtype),
        "b2": b2.reshape(c_out, 1).astype(jnp.float32),
    }


def mlp_forward(x_nchw, prepared, *, tok_tile=512, hid_sub=512,
                gelu_approx=True):
    """Full Mlp.forward: x (B, C, H, W) -> (B, C_out, H, W).

    `prepared` must come from prepare_params() (bf16 weights, padded hidden).
    """
    w1, b1 = prepared["w1"], prepared["b1"]
    w2, b2 = prepared["w2"], prepared["b2"]
    B, C, H, W = x_nchw.shape
    hid_pad, c_in = w1.shape
    c_out = w2.shape[0]
    assert c_in == C, (c_in, C)

    hw = H * W
    x = x_nchw.reshape(B, C, hw)               # free reshape, no transpose

    # --- token tiling (lane axis; multiples of 128, zero-padded) ------------
    tok_tile = _round_up(max(int(tok_tile), 128), 128)
    tok_t = min(tok_tile, _round_up(hw, 128))
    if B == 1 and hw > 128:
        # Ensure the parallel grid axes give >= 2 iterations so both v7x
        # TensorCores get work (negligible cost on 1-TC chips).
        tok_t = min(tok_t, max(128, _round_up((hw + 1) // 2, 128)))
    hw_pad = _round_up(hw, tok_t)
    if hw_pad != hw:
        x = jnp.pad(x, ((0, 0), (0, 0), (0, hw_pad - hw)))
    n_tok = hw_pad // tok_t

    # --- hidden-axis chunking -----------------------------------------------
    hid_sub = _round_up(max(int(hid_sub), 128), 128)
    if hid_pad > hid_sub and hid_pad % hid_sub == 0:
        hid_chunk = hid_sub
    else:
        hid_chunk = hid_pad
    n_sub = hid_pad // hid_chunk

    # --- generation-aware VMEM budget ----------------------------------------
    x_itm = jnp.dtype(x.dtype).itemsize
    o_itm = jnp.dtype(x_nchw.dtype).itemsize
    cap = _vmem_capacity_bytes()
    budget = (cap * 3) // 4                    # ~48 MiB v7x, ~96 MiB v5e/v6e
    headroom = 4 << 20                         # Mosaic internal scratch, spills

    # Resident plan: weights counted twice (the pipeline double-buffers every
    # BlockSpec input even though constant-index blocks are fetched only once).
    w_bytes = 2 * (_nbytes(w1.shape, w1.dtype) + _nbytes(b1.shape, b1.dtype)
                   + _nbytes(w2.shape, w2.dtype) + _nbytes(b2.shape, b2.dtype))
    io_bytes = 2 * (c_in * tok_t * x_itm + c_out * tok_t * o_itm)
    tmp_bytes = 2 * hid_chunk * tok_t * 4 + c_out * tok_t * 4
    resident_bytes = w_bytes + io_bytes + tmp_bytes + headroom

    out_shape = jax.ShapeDtypeStruct((B, c_out, hw_pad), x_nchw.dtype)

    if resident_bytes <= budget:
        # ---------------- weight-resident path (main) -----------------------
        kernel = functools.partial(_mlp_resident_kernel, n_sub=n_sub,
                                   hid_chunk=hid_chunk,
                                   gelu_approx=gelu_approx)
        vmem_limit = int(min(max(resident_bytes, 32 << 20), budget))
        out = pl.pallas_call(
            kernel,
            out_shape=out_shape,
            grid_spec=pltpu.PrefetchScalarGridSpec(
                num_scalar_prefetch=0,
                grid=(B, n_tok),
                in_specs=[
                    pl.BlockSpec((1, c_in, tok_t), lambda b, t: (b, 0, t)),
                    # Constant index_maps -> weights DMA'd from HBM once,
                    # VMEM-resident for the whole kernel.
                    pl.BlockSpec((hid_pad, c_in), lambda b, t: (0, 0)),
                    pl.BlockSpec((hid_pad, 1), lambda b, t: (0, 0)),
                    pl.BlockSpec((c_out, hid_pad), lambda b, t: (0, 0)),
                    pl.BlockSpec((c_out, 1), lambda b, t: (0, 0)),
                ],
                out_specs=pl.BlockSpec((1, c_out, tok_t),
                                       lambda b, t: (b, 0, t)),
            ),
            compiler_params=pltpu.CompilerParams(
                dimension_semantics=("parallel", "parallel"),
                vmem_limit_bytes=vmem_limit,
            ),
        )(x, w1, b1, w2, b2)
    else:
        # ---------------- k-tiled fallback (huge weights) --------------------
        hid_t = hid_chunk
        n_k = hid_pad // hid_t
        kernel = functools.partial(_mlp_ktiled_kernel, gelu_approx=gelu_approx)
        w_itm = jnp.dtype(w1.dtype).itemsize
        fb_bytes = (2 * (c_in * tok_t * x_itm
                         + hid_t * c_in * w_itm + hid_t * 4
                         + c_out * hid_t * w_itm + c_out * 4
                         + c_out * tok_t * o_itm)
                    + c_out * tok_t * 4            # f32 accumulator scratch
                    + 2 * hid_t * tok_t * 4        # h temporaries
                    + headroom)
        vmem_limit = int(min(max(fb_bytes, 32 << 20), budget))
        out = pl.pallas_call(
            kernel,
            out_shape=out_shape,
            grid_spec=pltpu.PrefetchScalarGridSpec(
                num_scalar_prefetch=0,
                grid=(B, n_tok, n_k),
                in_specs=[
                    pl.BlockSpec((1, c_in, tok_t), lambda b, t, k: (b, 0, t)),
                    pl.BlockSpec((hid_t, c_in), lambda b, t, k: (k, 0)),
                    pl.BlockSpec((hid_t, 1), lambda b, t, k: (k, 0)),
                    pl.BlockSpec((c_out, hid_t), lambda b, t, k: (0, k)),
                    pl.BlockSpec((c_out, 1), lambda b, t, k: (0, 0)),
                ],
                out_specs=pl.BlockSpec((1, c_out, tok_t),
                                       lambda b, t, k: (b, 0, t)),
                scratch_shapes=[pltpu.VMEM((c_out, tok_t), jnp.float32)],
            ),
            compiler_params=pltpu.CompilerParams(
                dimension_semantics=("parallel", "parallel", "arbitrary"),
                vmem_limit_bytes=vmem_limit,
            ),
        )(x, w1, b1, w2, b2)

    if hw_pad != hw:
        out = out[:, :, :hw]
    return out.reshape(B, c_out, H, W)


# ---------------------------------------------------------------------------
# Params / reference / self-test
# ---------------------------------------------------------------------------

def init_params(key, in_features, hidden_features=None, out_features=None,
                dtype=jnp.float32):
    """Weights stored in PyTorch nn.Linear layout: weight = (out, in)."""
    out_features = out_features or in_features
    hidden_features = hidden_features or in_features
    k1, k2, k3, k4 = jax.random.split(key, 4)
    s1 = 1.0 / jnp.sqrt(in_features)
    s2 = 1.0 / jnp.sqrt(hidden_features)
    return {
        "w1": jax.random.uniform(k1, (hidden_features, in_features),
                                 dtype, -s1, s1),
        "b1": jax.random.uniform(k2, (hidden_features,), dtype, -s1, s1),
        "w2": jax.random.uniform(k3, (out_features, hidden_features),
                                 dtype, -s2, s2),
        "b2": jax.random.uniform(k4, (out_features,), dtype, -s2, s2),
    }


def _reference_mlp(x_nchw, params):
    """Pure-JAX f32 mirror of the PyTorch forward (exact erf GELU)."""
    B, C, H, W = x_nchw.shape
    x = jnp.transpose(x_nchw, (0, 2, 3, 1)).reshape(B, H * W, C)
    h = x @ params["w1"].T + params["b1"]
    h = jax.nn.gelu(h, approximate=False)
    y = h @ params["w2"].T + params["b2"]
    y = y.reshape(B, H, W, -1)
    return jnp.transpose(y, (0, 3, 1, 2)).astype(x_nchw.dtype)


if __name__ == "__main__":
    key = jax.random.PRNGKey(0)
    kx, kp = jax.random.split(key)

    B, C, H, W = 2, 4, 16, 16          # H*W = 256 tokens per image
    hidden = 32

    x = jax.random.normal(kx, (B, C, H, W), jnp.float32)
    params = init_params(kp, in_features=C, hidden_features=hidden)

    # Weight prep hoisted out of the forward (done once, reused every call).
    prepared = prepare_params(params)

    fwd = jax.jit(functools.partial(mlp_forward, tok_tile=512, hid_sub=512))
    out = jax.block_until_ready(fwd(x, prepared))

    ref = _reference_mlp(x, params)
    assert out.shape == (B, C, H, W), out.shape
    # bf16 MXU inputs + tanh GELU vs f32 exact-erf reference.
    err = float(jnp.max(jnp.abs(out - ref)))
    assert jnp.allclose(out, ref, atol=2e-2, rtol=2e-2), err

    print("KERNEL_OK")
</pallas_src>

<mosaic_0001>
module attributes {stable_mosaic.version = 11 : i64} {
  func.func @_mlp_resident_kernel(%arg0: i32, %arg1: i32, %arg2: memref<1x4x256xf32, #tpu.memory_space<vmem>>, %arg3: memref<32x4xbf16, #tpu.memory_space<vmem>>, %arg4: memref<32x1xf32, #tpu.memory_space<vmem>>, %arg5: memref<4x32xbf16, #tpu.memory_space<vmem>>, %arg6: memref<4x1xf32, #tpu.memory_space<vmem>>, %arg7: memref<1x4x256xf32, #tpu.memory_space<vmem>>) attributes {dimension_semantics = [#tpu.dimension_semantics<parallel>, #tpu.dimension_semantics<parallel>], iteration_bounds = array<i64: 2, 1>, scalar_prefetch = 0 : i64, scratch_operands = 0 : i64, tpu.core_type = #tpu.core_type<tc>, window_params = [{transform_indices = @transform_0, window_bounds = array<i64: 1, 4, 256>}, {pipeline_mode = #tpu.pipeline_mode<synchronous>, transform_indices = @transform_1, window_bounds = array<i64: 32, 4>}, {pipeline_mode = #tpu.pipeline_mode<synchronous>, transform_indices = @transform_2, window_bounds = array<i64: 32, 1>}, {pipeline_mode = #tpu.pipeline_mode<synchronous>, transform_indices = @transform_3, window_bounds = array<i64: 4, 32>}, {pipeline_mode = #tpu.pipeline_mode<synchronous>, transform_indices = @transform_4, window_bounds = array<i64: 4, 1>}, {transform_indices = @transform_5, window_bounds = array<i64: 1, 4, 256>}]} {
    %c0 = arith.constant 0 : index
    %c0_0 = arith.constant 0 : index
    %c0_1 = arith.constant 0 : index
    %0 = vector.load %arg2[%c0, %c0_0, %c0_1] : memref<1x4x256xf32, #tpu.memory_space<vmem>>, vector<1x4x256xf32>
    %1 = vector.shape_cast %0 : vector<1x4x256xf32> to vector<4x256xf32>
    %2 = arith.truncf %1 : vector<4x256xf32> to vector<4x256xbf16>
    %c0_2 = arith.constant 0 : index
    %c0_3 = arith.constant 0 : index
    %3 = vector.load %arg3[%c0_2, %c0_3] : memref<32x4xbf16, #tpu.memory_space<vmem>>, vector<32x4xbf16>
    %cst = arith.constant dense<0.000000e+00> : vector<32x256xf32>
    %4 = tpu.matmul %3, %2, %cst {dimension_numbers = #tpu.dot_dimension_numbers<[1], [0], [0], [1], [0, 0, 1, 1], [], []>} : vector<32x4xbf16>, vector<4x256xbf16>, vector<32x256xf32> -> vector<32x256xf32>
    %c0_4 = arith.constant 0 : index
    %c0_5 = arith.constant 0 : index
    %5 = vector.load %arg4[%c0_4, %c0_5] : memref<32x1xf32, #tpu.memory_space<vmem>>, vector<32x1xf32>
    %6 = vector.broadcast %5 : vector<32x1xf32> to vector<32x256xf32>
    %7 = arith.addf %4, %6 : vector<32x256xf32>
    %8 = arith.mulf %7, %7 : vector<32x256xf32>
    %9 = arith.mulf %7, %8 : vector<32x256xf32>
    %cst_6 = arith.constant 4.471500e-02 : f32
    %10 = vector.broadcast %cst_6 : f32 to vector<32x256xf32>
    %11 = arith.mulf %10, %9 : vector<32x256xf32>
    %12 = arith.addf %7, %11 : vector<32x256xf32>
    %cst_7 = arith.constant 0.797884583 : f32
    %13 = vector.broadcast %cst_7 : f32 to vector<32x256xf32>
    %14 = arith.mulf %13, %12 : vector<32x256xf32>
    %15 = math.tanh %14 : vector<32x256xf32>
    %cst_8 = arith.constant 1.000000e+00 : f32
    %16 = vector.broadcast %cst_8 : f32 to vector<32x256xf32>
    %17 = arith.addf %16, %15 : vector<32x256xf32>
    %cst_9 = arith.constant 5.000000e-01 : f32
    %18 = vector.broadcast %cst_9 : f32 to vector<32x256xf32>
    %19 = arith.mulf %18, %17 : vector<32x256xf32>
    %20 = arith.mulf %7, %19 : vector<32x256xf32>
    %c0_10 = arith.constant 0 : index
    %c0_11 = arith.constant 0 : index
    %21 = vector.load %arg5[%c0_10, %c0_11] : memref<4x32xbf16, #tpu.memory_space<vmem>>, vector<4x32xbf16>
    %22 = arith.truncf %20 : vector<32x256xf32> to vector<32x256xbf16>
    %cst_12 = arith.constant dense<0.000000e+00> : vector<4x256xf32>
    %23 = tpu.matmul %21, %22, %cst_12 {dimension_numbers = #tpu.dot_dimension_numbers<[1], [0], [0], [1], [0, 0, 1, 1], [], []>} : vector<4x32xbf16>, vector<32x256xbf16>, vector<4x256xf32> -> vector<4x256xf32>
    %c0_13 = arith.constant 0 : index
    %c0_14 = arith.constant 0 : index
    %24 = vector.load %arg6[%c0_13, %c0_14] : memref<4x1xf32, #tpu.memory_space<vmem>>, vector<4x1xf32>
    %25 = vector.broadcast %24 : vector<4x1xf32> to vector<4x256xf32>
    %26 = arith.addf %23, %25 : vector<4x256xf32>
    %c0_15 = arith.constant 0 : index
    %c0_16 = arith.constant 0 : index
    %c0_17 = arith.constant 0 : index
    %27 = vector.load %arg7[%c0_15, %c0_16, %c0_17] : memref<1x4x256xf32, #tpu.memory_space<vmem>>, vector<1x4x256xf32>
    %28 = vector.shape_cast %27 : vector<1x4x256xf32> to vector<4x256xf32>
    %29 = vector.shape_cast %26 : vector<4x256xf32> to vector<1x4x256xf32>
    tpu.vector_store %arg7[%c0_15, %c0_16, %c0_17], %29 {strides = array<i32>} : memref<1x4x256xf32, #tpu.memory_space<vmem>>, vector<1x4x256xf32>,
    return
  }
  func.func @transform_0(%arg0: i32, %arg1: i32) -> (i32, i32, i32) {
    %c0_i32 = arith.constant 0 : i32
    %c0_i32_0 = arith.constant 0 : i32
    return %arg0, %c0_i32, %arg1 : i32, i32, i32
  }
  func.func @transform_1(%arg0: i32, %arg1: i32) -> (i32, i32) {
    %c0_i32 = arith.constant 0 : i32
    %c0_i32_0 = arith.constant 0 : i32
    %c0_i32_1 = arith.constant 0 : i32
    return %c0_i32, %c0_i32_0 : i32, i32
  }
  func.func @transform_2(%arg0: i32, %arg1: i32) -> (i32, i32) {
    %c0_i32 = arith.constant 0 : i32
    %c0_i32_0 = arith.constant 0 : i32
    %c0_i32_1 = arith.constant 0 : i32
    return %c0_i32, %c0_i32_0 : i32, i32
  }
  func.func @transform_3(%arg0: i32, %arg1: i32) -> (i32, i32) {
    %c0_i32 = arith.constant 0 : i32
    %c0_i32_0 = arith.constant 0 : i32
    %c0_i32_1 = arith.constant 0 : i32
    return %c0_i32, %c0_i32_0 : i32, i32
  }
  func.func @transform_4(%arg0: i32, %arg1: i32) -> (i32, i32) {
    %c0_i32 = arith.constant 0 : i32
    %c0_i32_0 = arith.constant 0 : i32
    %c0_i32_1 = arith.constant 0 : i32
    return %c0_i32, %c0_i32_0 : i32, i32
  }
  func.func @transform_5(%arg0: i32, %arg1: i32) -> (i32, i32, i32) {
    %c0_i32 = arith.constant 0 : i32
    %c0_i32_0 = arith.constant 0 : i32
    return %arg0, %c0_i32, %arg1 : i32, i32, i32
  }
}

</mosaic_0001>

<llo_original>
// kernel: mlp_forward.1
$region0: #{mlp_forward.1}
  #allocation0 [shape = 'u32[]', space=smem, size = 0x4, offset = 0x4, fixed_abs, tag = 'smem constant byte address 0x4 - core index']
  #allocation1 [shape = 'u32[144,128]{1,0:T(1,128)}', space=vmem, size = 0x12000, scoped, tag = 'internal scratch']
  %s0 = inlined_call_operand.vmem [shape: f32[2,4,256], index: 0, kind: input, shape index: {}]
  %s1 = inlined_call_operand.vmem [shape: bf16[32,4], index: 1, kind: input, shape index: {}]
  %s2 = inlined_call_operand.vmem [shape: f32[32,1], index: 2, kind: input, shape index: {}]
  %s3 = inlined_call_operand.vmem [shape: bf16[4,32], index: 3, kind: input, shape index: {}]
  %s4 = inlined_call_operand.vmem [shape: f32[4,1], index: 4, kind: input, shape index: {}]
  %s5 = inlined_call_operand.vmem [shape: f32[2,4,256], index: 5, kind: output, shape index: {}]
  %s6 = sld [smem:[#allocation0]]
  $region53: #{mlp_forward.1} parent=0
    _
  %s8 = ssub.s32 1, %s6
  %s9 = scalar_select 0, %s8, %s6
  loop: start=0, step=1, limit=4
  $region2: #{mlp_forward.1} parent=0 // loop_pre_header
    _
  $region3: #{mlp_forward.1} parent=0 // loop_header
    %s11 = sphi 0, %s15
    %p12 = scmp.ge.s32.totalorder %s11, 4
    %s18 = sphi 0, %s30
    %s19 = sphi 0, %s26
    %s20 = sphi 0, %s18
    %s21 = sphi 0, %s19
    %s22 = sphi 0, %s20
    %s23 = sphi 0, %s21
    %s35 = sphi 0, %s37
    %s38 = sphi 0, %s35
    %s39 = sphi 0, %s38
    %s55 = sphi 0, %s39
    %s59 = sphi 0, %s59
    %s61 = sphi 0, %s59
    %s62 = sphi 0, %s61
    %s76 = sphi 0, %s62
    %s80 = sphi 0, %s80
    %s82 = sphi 0, %s80
    %s83 = sphi 0, %s82
    %s97 = sphi 0, %s83
    %s101 = sphi 0, %s101
    %s103 = sphi 0, %s101
    %s104 = sphi 0, %s103
    %s118 = sphi 0, %s104
    %s122 = sphi 0, %s122
    %s124 = sphi 0, %s122
    %s125 = sphi 0, %s124
    %s139 = sphi 0, %s125
    %s147 = sphi 0, %s149
    %s150 = sphi 0, %s147
    %s151 = sphi 0, %s150
    %s167 = sphi 0, %s151
  $region4: #{mlp_forward.1} parent=0 // loop_header_branch
    %14 = sbr.rel (%p12) target = $region8
  $region5: #{mlp_forward.1} parent=0 // loop_body
    %s16 = ssub.s32 %s11, 1
    %s17 = ssub.s32 %s11, 2
    %s24 = sadd.s32 1, %s19
    %p25 = scmp.ge.s32.totalorder %s24, 1
    %s26 = scalar_select %p25, 0, %s24
    %s27 = sadd.s32 1, %s18
    %s28 = scalar_select %p25, %s27, %s18
    %p29 = scmp.ge.s32.totalorder %s28, 2
    %s30 = scalar_select %p29, 0, %s28
    %s31 = ssub.s32 %s18, %s30
    %s32 = ssub.s32 %s19, %s26
    %s33 = sor.u32 %s31, %s32
    %p34 = scmp.eq.s32.totalorder %s33, 0
    %s36 = sadd.s32 %s35, 1
    %s37 = scalar_select %p34, %s35, %s36
    %p40 = pneg %p34
    %p41 = scmp.eq.s32.totalorder %s11, 1
    %p42 = por %p40, %p41
    %p43 = scmp.ne.s32.totalorder %s35, %s38
    %p44 = scmp.eq.s32.totalorder %s11, 0
    %p45 = por %p43, %p44
    %p46 = scmp.ne.s32.totalorder %s35, %s38
    %p47 = scmp.eq.s32.totalorder %s16, 1
    %p48 = por %p46, %p47
    %p49 = scmp.ne.s32.totalorder %s38, %s39
    %p50 = scmp.eq.s32.totalorder %s16, 0
    %p51 = por %p49, %p50
    %p52 = scmp.ne.s32.totalorder %s38, %s39
    %p53 = scmp.eq.s32.totalorder %s17, 1
    %p54 = por %p52, %p53
    %p56 = scmp.ne.s32.totalorder %s39, %s55
    %p57 = scmp.eq.s32.totalorder %s17, 0
    %p58 = por %p56, %p57
    %s60 = sadd.s32 %s59, 1
    %p63 = scmp.eq.s32.totalorder %s11, 1
    %p64 = scmp.ne.s32.totalorder %s59, %s61
    %p65 = scmp.eq.s32.totalorder %s11, 0
    %p66 = por %p64, %p65
    %p67 = scmp.ne.s32.totalorder %s59, %s61
    %p68 = scmp.eq.s32.totalorder %s16, 1
    %p69 = por %p67, %p68
    %p70 = scmp.ne.s32.totalorder %s61, %s62
    %p71 = scmp.eq.s32.totalorder %s16, 0
    %p72 = por %p70, %p71
    %p73 = scmp.ne.s32.totalorder %s61, %s62
    %p74 = scmp.eq.s32.totalorder %s17, 1
    %p75 = por %p73, %p74
    %p77 = scmp.ne.s32.totalorder %s62, %s76
    %p78 = scmp.eq.s32.totalorder %s17, 0
    %p79 = por %p77, %p78
    %s81 = sadd.s32 %s80, 1
    %p84 = scmp.eq.s32.totalorder %s11, 1
    %p85 = scmp.ne.s32.totalorder %s80, %s82
    %p86 = scmp.eq.s32.totalorder %s11, 0
    %p87 = por %p85, %p86
    %p88 = scmp.ne.s32.totalorder %s80, %s82
    %p89 = scmp.eq.s32.totalorder %s16, 1
    %p90 = por %p88, %p89
    %p91 = scmp.ne.s32.totalorder %s82, %s83
    %p92 = scmp.eq.s32.totalorder %s16, 0
    %p93 = por %p91, %p92
    %p94 = scmp.ne.s32.totalorder %s82, %s83
    %p95 = scmp.eq.s32.totalorder %s17, 1
    %p96 = por %p94, %p95
    %p98 = scmp.ne.s32.totalorder %s83, %s97
    %p99 = scmp.eq.s32.totalorder %s17, 0
    %p100 = por %p98, %p99
    %s102 = sadd.s32 %s101, 1
    %p105 = scmp.eq.s32.totalorder %s11, 1
    %p106 = scmp.ne.s32.totalorder %s101, %s103
    %p107 = scmp.eq.s32.totalorder %s11, 0
    %p108 = por %p106, %p107
    %p109 = scmp.ne.s32.totalorder %s101, %s103
    %p110 = scmp.eq.s32.totalorder %s16, 1
    %p111 = por %p109, %p110
    %p112 = scmp.ne.s32.totalorder %s103, %s104
    %p113 = scmp.eq.s32.totalorder %s16, 0
    %p114 = por %p112, %p113
    %p115 = scmp.ne.s32.totalorder %s103, %s104
    %p116 = scmp.eq.s32.totalorder %s17, 1
    %p117 = por %p115, %p116
    %p119 = scmp.ne.s32.totalorder %s104, %s118
    %p120 = scmp.eq.s32.totalorder %s17, 0
    %p121 = por %p119, %p120
    %s123 = sadd.s32 %s122, 1
    %p126 = scmp.eq.s32.totalorder %s11, 1
    %p127 = scmp.ne.s32.totalorder %s122, %s124
    %p128 = scmp.eq.s32.totalorder %s11, 0
    %p129 = por %p127, %p128
    %p130 = scmp.ne.s32.totalorder %s122, %s124
    %p131 = scmp.eq.s32.totalorder %s16, 1
    %p132 = por %p130, %p131
    %p133 = scmp.ne.s32.totalorder %s124, %s125
    %p134 = scmp.eq.s32.totalorder %s16, 0
    %p135 = por %p133, %p134
    %p136 = scmp.ne.s32.totalorder %s124, %s125
    %p137 = scmp.eq.s32.totalorder %s17, 1
    %p138 = por %p136, %p137
    %p140 = scmp.ne.s32.totalorder %s125, %s139
    %p141 = scmp.eq.s32.totalorder %s17, 0
    %p142 = por %p140, %p141
    %s143 = ssub.s32 %s18, %s30
    %s144 = ssub.s32 %s19, %s26
    %s145 = sor.u32 %s143, %s144
    %p146 = scmp.eq.s32.totalorder %s145, 0
    %s148 = sadd.s32 %s147, 1
    %s149 = scalar_select %p146, %s147, %s148
    %p152 = pneg %p146
    %p153 = scmp.eq.s32.totalorder %s11, 1
    %p154 = por %p152, %p153
    %p155 = scmp.ne.s32.totalorder %s147, %s150
    %p156 = scmp.eq.s32.totalorder %s11, 0
    %p157 = por %p155, %p156
    %p158 = scmp.ne.s32.totalorder %s147, %s150
    %p159 = scmp.eq.s32.totalorder %s16, 1
    %p160 = por %p158, %p159
    %p161 = scmp.ne.s32.totalorder %s150, %s151
    %p162 = scmp.eq.s32.totalorder %s16, 0
    %p163 = por %p161, %p162
    %p164 = scmp.ne.s32.totalorder %s150, %s151
    %p165 = scmp.eq.s32.totalorder %s17, 1
    %p166 = por %p164, %p165
    %p168 = scmp.ne.s32.totalorder %s151, %s167
    %p169 = scmp.eq.s32.totalorder %s17, 0
    %p170 = por %p168, %p169
    %p171 = scmp.le.s32.totalorder 1, %s11
    %p172 = scmp.lt.s32.totalorder %s11, 3
    %p173 = pnand %p171, %p172
    %p174 = pneg %p173
    // Predicated region
    $region9: #{mlp_forward.1} parent=5 // pred_check
      _
    $region10: #{mlp_forward.1} parent=5 // pred_check_branch
      %176 = sbr.rel (%p173) target = $region12
    $region11: #{mlp_forward.1} parent=5 // pred_region
      %s177 = ssub.s32 %s11, 1
      // Predicated region
      $region13: #{mlp_forward.1} parent=11 // pred_check
        %p178 = pneg %p72
      $region14: #{mlp_forward.1} parent=11 // pred_check_branch
        %180 = sbr.rel (%p178) target = $region16
      $region15: #{mlp_forward.1} parent=11 // pred_region
        _
      $region16: #{mlp_forward.1} parent=11 // pred_fallthru
        _
      // Predicated region
      $region17: #{mlp_forward.1} parent=11 // pred_check
        %p181 = pneg %p93
      $region18: #{mlp_forward.1} parent=11 // pred_check_branch
        %183 = sbr.rel (%p181) target = $region20
      $region19: #{mlp_forward.1} parent=11 // pred_region
        _
      $region20: #{mlp_forward.1} parent=11 // pred_fallthru
        _
      // Predicated region
      $region21: #{mlp_forward.1} parent=11 // pred_check
        %p184 = pneg %p114
      $region22: #{mlp_forward.1} parent=11 // pred_check_branch
        %186 = sbr.rel (%p184) target = $region24
      $region23: #{mlp_forward.1} parent=11 // pred_region
        _
      $region24: #{mlp_forward.1} parent=11 // pred_fallthru
        _
      // Predicated region
      $region25: #{mlp_forward.1} parent=11 // pred_check
        %p187 = pneg %p135
      $region26: #{mlp_forward.1} parent=11 // pred_check_branch
        %189 = sbr.rel (%p187) target = $region28
      $region27: #{mlp_forward.1} parent=11 // pred_region
        _
      $region28: #{mlp_forward.1} parent=11 // pred_fallthru
        _
    $region12: #{mlp_forward.1} parent=5 // pred_fallthru
      _
    %p190 = scmp.lt.s32.totalorder %s11, 2
    // Predicated region
    $region29: #{mlp_forward.1} parent=5 // pred_check
      %p191 = pneg %p190
    $region30: #{mlp_forward.1} parent=5 // pred_check_branch
      %193 = sbr.rel (%p191) target = $region32
    $region31: #{mlp_forward.1} parent=5 // pred_region
      // Predicated region
      $region33: #{mlp_forward.1} parent=31 // pred_check
        %p194 = pneg %p45
      $region34: #{mlp_forward.1} parent=31 // pred_check_branch
        %196 = sbr.rel (%p194) target = $region36
      $region35: #{mlp_forward.1} parent=31 // pred_region
        %s197 = smul.u32 2, %s19
        %p198 = scmp.lt.s32.totalorder %s18, 1
        %s199 = scalar_select %p198, %s18, 1
        %p200 = scmp.lt.s32.totalorder %s197, 1
        %s201 = scalar_select %p200, %s197, 1
        %s202 = smul.addr %s199, 2
        %s203 = sadd.s32 %s201, %s202
        %s204 = smul.addr %s203, 4
        %s205 = scalar_lea.vmem %s0, %s204
        %s206 = smul.u32 2, %s19
      $region36: #{mlp_forward.1} parent=31 // pred_fallthru
        _
    $region32: #{mlp_forward.1} parent=5 // pred_fallthru
      _
    %p207 = scmp.le.s32.totalorder 1, %s11
    %p208 = scmp.lt.s32.totalorder %s11, 3
    %p209 = pnand %p207, %p208
    %p210 = pneg %p209
    // Predicated region
    $region37: #{mlp_forward.1} parent=5 // pred_check
      _
    $region38: #{mlp_forward.1} parent=5 // pred_check_branch
      %212 = sbr.rel (%p209) target = $region40
    $region39: #{mlp_forward.1} parent=5 // pred_region
      %s213 = ssub.s32 %s11, 1
      %s214 = smul.u32 2, %s21
      %p215 = scmp.lt.s32.totalorder %s20, 1
      %s216 = scalar_select %p215, %s20, 1
      %p217 = scmp.lt.s32.totalorder %s214, 1
      %s218 = scalar_select %p217, %s214, 1
      %s219 = smul.addr %s216, 2
      %s220 = sadd.s32 %s218, %s219
      %s221 = smul.addr %s220, 4
      %s222 = scalar_lea.vmem %s0, %s221
      %p223 = pneg %p51
      %p224 = pneg %p48
      %p225 = pneg %p72
      %p226 = pneg %p69
      %p227 = pneg %p93
      %p228 = pneg %p90
      %p229 = pneg %p114
      %p230 = pneg %p111
      %p231 = pneg %p135
      %p232 = pneg %p132
      %p233 = pneg %p163
      %p234 = pneg %p160
      %s235 = smul.u32 2, %s21
      %p236 = scmp.lt.s32.totalorder %s20, 1
      %s237 = scalar_select %p236, %s20, 1
      %p238 = scmp.lt.s32.totalorder %s235, 1
      %s239 = scalar_select %p238, %s235, 1
      %s240 = smul.addr %s237, 2
      %s241 = sadd.s32 %s239, %s240
      %s242 = smul.addr %s241, 4
      %s243 = scalar_lea.vmem %s5, %s242
      %s244 = smul.u32 2, %s21
      %p245 = scmp.lt.s32.totalorder %s20, 1
      %s246 = scalar_select %p245, %s20, 1
      %p247 = scmp.lt.s32.totalorder %s244, 1
      %s248 = scalar_select %p247, %s244, 1
      %s249 = smul.addr %s246, 2
      %s250 = sadd.s32 %s248, %s249
      %s251 = smul.addr %s250, 4
      %s252 = scalar_lea.vmem %s0, %s251
      %s253 = smul.u32 2, %s21
      %s254 = smul.u32 2, %s21
      %p255 = scmp.lt.s32.totalorder %s20, 1
      %s256 = scalar_select %p255, %s20, 1
      %p257 = scmp.lt.s32.totalorder %s254, 1
      %s258 = scalar_select %p257, %s254, 1
      %s259 = smul.addr %s256, 2
      %s260 = sadd.s32 %s258, %s259
      %s261 = smul.addr %s260, 4
      %s262 = scalar_lea.vmem %s5, %s261
      %s263 = smul.u32 2, %s21
      %v265 = vld [vmem:[%s252] sm:$0xff]
      %v267 = vcombine.high %v265, %v265
      %v269 = vpack.c.bf16 %v265, %v265
      %v270 = vpack.c.bf16 %v267, %v267
      %v271 = vld [vmem:[%s1] sm:$0xf]
      %v272 = vld [vmem:[%s1 + $0x4] sm:$0xf]
      %v273 = vld [vmem:[%s1 + $0x8] sm:$0xf]
      %v274 = vld [vmem:[%s1 + $0xc] sm:$0xf]
      %v275 = vld [vmem:[%s2] sm:$0xff]
      %v276 = vld [vmem:[%s2 + $0x8] sm:$0xff]
      %v277 = vld [vmem:[%s2 + $0x10] sm:$0xff]
      %v278 = vld [vmem:[%s2 + $0x18] sm:$0xff]
      %280 = vset.pattern.permute.xlu0 0
      %281 = vperm.xlu0 %280, %v275
      %v282 = vpop.permute.xlu0 %281
      %285 = vset.pattern.permute.xlu0 0
      %286 = vperm.xlu0 %285, %v276
      %v287 = vpop.permute.xlu0 %286
      %290 = vset.pattern.permute.xlu0 0
      %291 = vperm.xlu0 %290, %v277
      %v292 = vpop.permute.xlu0 %291
      %295 = vset.pattern.permute.xlu0 0
      %296 = vperm.xlu0 %295, %v278
      %v297 = vpop.permute.xlu0 %296
      %v303 = vunpack.c.l.b16 %v271
      %v304 = vunpack.c.l.b16 %v272
      %v305 = vunpack.c.l.b16 %v273
      %v306 = vunpack.c.l.b16 %v274
      %v307 = vpack.c.b16 %v304, %v303
      %v308 = vpack.c.b16 %v306, %v305
      %vm309 = vcmask 31744
      %v311 = vsel %vm309, %v307, 0
      %v314 = vsel %vm309, %v308, 0
      %vm316 = vcmask 1041408
      %v318 = vsel %vm316, %v269, 0
      %v321 = vsel %vm316, %v270, 0
      %323 = vmatprep.subr.bf16.mxu0 0
      %324 = vmatpush1.bf16.msra.mxu0 0
      %325 = vmatprep.subr.bf16.mxu0 0
      %326 = vmatpush1.bf16.msra.mxu0 0
      %327 = vmatprep.subr.bf16.mxu0 0
      %328 = vmatpush1.bf16.msra.mxu0 0
      %329 = vmatprep.subr.bf16.mxu0 0
      %330 = vmatpush1.bf16.msra.mxu0 0
      %331 = vmatprep.subr.bf16.mxu0 0
      %332 = vmatpush1.bf16.msra.mxu0 0
      %333 = vmatprep.subr.bf16.mxu0 0
      %334 = vmatpush1.bf16.msra.mxu0 0
      %335 = vmatprep.subr.bf16.mxu0 0
      %336 = vmatpush1.bf16.msra.mxu0 0
      %337 = vmatprep.subr.bf16.mxu0 %v321
      %338 = vmatpush1.bf16.msra.mxu0 %v318
      %339 = vmatprep.subr.bf16.mxu0 0
      %340 = vmatpush2.bf16.msra.mxu0 0
      %341 = vmatprep.subr.bf16.mxu0 0
      %342 = vmatpush2.bf16.msra.mxu0 0
      %343 = vmatprep.subr.bf16.mxu0 0
      %344 = vmatpush2.bf16.msra.mxu0 0
      %345 = vmatprep.subr.bf16.mxu0 0
      %346 = vmatpush2.bf16.msra.mxu0 0
      %347 = vmatprep.subr.bf16.mxu0 0
      %348 = vmatpush2.bf16.msra.mxu0 0
      %349 = vmatprep.subr.bf16.mxu0 0
      %350 = vmatpush2.bf16.msra.mxu0 0
      %351 = vmatprep.subr.bf16.mxu0 0
      %352 = vmatpush2.bf16.msra.mxu0 0
      %353 = vmatprep.subr.bf16.mxu0 0
      %354 = vmatpush2.bf16.msra.mxu0 0
      %355 = vmatprep.mubr.bf16.mxu0 0
      %356 = vmatmul.mubr.bf16.gmra.mxu0 %v311
      %v357 = vpop.f32.mrf.mxu0
      %v358 = vadd.f32 %v282, %v357
      %v359 = vpop.f32.mrf.mxu0
      %v360 = vadd.f32 %v282, %v359
      %v361 = vpop.f32.mrf.mxu0
      %v362 = vadd.f32 %v287, %v361
      %v363 = vpop.f32.mrf.mxu0
      %v364 = vadd.f32 %v287, %v363
      %365 = vmatprep.mubr.bf16.mxu0 0
      %366 = vmatmul.mubr.bf16.gmra.mxu0 %v314
      %v367 = vpop.f32.mrf.mxu0
      %v368 = vadd.f32 %v292, %v367
      %v369 = vpop.f32.mrf.mxu0
      %v370 = vadd.f32 %v292, %v369
      %v371 = vpop.f32.mrf.mxu0
      %v372 = vadd.f32 %v297, %v371
      %v373 = vpop.f32.mrf.mxu0
      %v374 = vadd.f32 %v297, %v373
      %375 = vdwg.mxu0
      %v376 = vmul.f32 %v358, %v358
      %v377 = vmul.f32 %v360, %v360
      %v378 = vmul.f32 %v362, %v362
      %v379 = vmul.f32 %v364, %v364
      %v380 = vmul.f32 %v368, %v368
      %v381 = vmul.f32 %v370, %v370
      %v382 = vmul.f32 %v372, %v372
      %v383 = vmul.f32 %v374, %v374
      %v384 = vmul.f32 %v358, %v376
      %v385 = vmul.f32 %v360, %v377
      %v386 = vmul.f32 %v362, %v378
      %v387 = vmul.f32 %v364, %v379
      %v388 = vmul.f32 %v368, %v380
      %v389 = vmul.f32 %v370, %v381
      %v390 = vmul.f32 %v372, %v382
      %v391 = vmul.f32 %v374, %v383
      %v392 = vmul.f32 %v384, 0.044715
      %v393 = vmul.f32 %v385, 0.044715
      %v394 = vmul.f32 %v386, 0.044715
      %v395 = vmul.f32 %v387, 0.044715
      %v396 = vmul.f32 %v388, 0.044715
      %v397 = vmul.f32 %v389, 0.044715
      %v398 = vmul.f32 %v390, 0.044715
      %v399 = vmul.f32 %v391, 0.044715
      %v400 = vadd.f32 %v358, %v392
      %v401 = vadd.f32 %v360, %v393
      %v402 = vadd.f32 %v362, %v394
      %v403 = vadd.f32 %v364, %v395
      %v404 = vadd.f32 %v368, %v396
      %v405 = vadd.f32 %v370, %v397
      %v406 = vadd.f32 %v372, %v398
      %v407 = vadd.f32 %v374, %v399
      %v408 = vmul.f32 %v400, 0.7978846
      %v409 = vmul.f32 %v401, 0.7978846
      %v410 = vmul.f32 %v402, 0.7978846
      %v411 = vmul.f32 %v403, 0.7978846
      %v412 = vmul.f32 %v404, 0.7978846
      %v413 = vmul.f32 %v405, 0.7978846
      %v414 = vmul.f32 %v406, 0.7978846
      %v415 = vmul.f32 %v407, 0.7978846
      %v416 = vtanh.pop %v408
      %v417 = vtanh.pop %v409
      %v418 = vtanh.pop %v410
      %v419 = vtanh.pop %v411
      %v420 = vtanh.pop %v412
      %v421 = vtanh.pop %v413
      %v422 = vtanh.pop %v414
      %v423 = vtanh.pop %v415
      %v424 = vadd.f32 %v416, 1.0
      %v425 = vadd.f32 %v417, 1.0
      %v426 = vadd.f32 %v418, 1.0
      %v427 = vadd.f32 %v419, 1.0
      %v428 = vadd.f32 %v420, 1.0
      %v429 = vadd.f32 %v421, 1.0
      %v430 = vadd.f32 %v422, 1.0
      %v431 = vadd.f32 %v423, 1.0
      %v432 = vmul.f32 %v424, 0.5
      %v433 = vmul.f32 %v425, 0.5
      %v434 = vmul.f32 %v426, 0.5
      %v435 = vmul.f32 %v427, 0.5
      %v436 = vmul.f32 %v428, 0.5
      %v437 = vmul.f32 %v429, 0.5
      %v438 = vmul.f32 %v430, 0.5
      %v439 = vmul.f32 %v431, 0.5
      %v440 = vmul.f32 %v358, %v432
      %v441 = vmul.f32 %v360, %v433
      %v442 = vmul.f32 %v362, %v434
      %v443 = vmul.f32 %v364, %v435
      %v444 = vmul.f32 %v368, %v436
      %v445 = vmul.f32 %v370, %v437
      %v446 = vmul.f32 %v372, %v438
      %v447 = vmul.f32 %v374, %v439
      %v448 = vld [vmem:[%s3] sm:$0x3]
      %v449 = vpack.c.bf16 %v442, %v440
      %v450 = vpack.c.bf16 %v443, %v441
      %v451 = vpack.c.bf16 %v446, %v444
      %v452 = vpack.c.bf16 %v447, %v445
      %v453 = vld [vmem:[%s4] sm:$0xf]
      %455 = vset.pattern.permute.xlu0 0
      %456 = vperm.xlu0 %455, %v453
      %v457 = vpop.permute.xlu0 %456
      %vm459 = vcmask 261120
      %v461 = vsel %vm459, %v448, 0
      %463 = vmatprep.subr.bf16.mxu0 0
      %464 = vmatpush1.bf16.msra.mxu0 0
      %465 = vmatprep.subr.bf16.mxu0 0
      %466 = vmatpush1.bf16.msra.mxu0 0
      %467 = vmatprep.subr.bf16.mxu0 0
      %468 = vmatpush1.bf16.msra.mxu0 0
      %469 = vmatprep.subr.bf16.mxu0 0
      %470 = vmatpush1.bf16.msra.mxu0 0
      %471 = vmatprep.subr.bf16.mxu0 0
      %472 = vmatpush1.bf16.msra.mxu0 0
      %473 = vmatprep.subr.bf16.mxu0 0
      %474 = vmatpush1.bf16.msra.mxu0 0
      %475 = vmatprep.subr.bf16.mxu0 %v452
      %476 = vmatpush1.bf16.msra.mxu0 %v451
      %477 = vmatprep.subr.bf16.mxu0 %v450
      %478 = vmatpush1.bf16.msra.mxu0 %v449
      %479 = vmatprep.subr.bf16.mxu0 0
      %480 = vmatpush2.bf16.msra.mxu0 0
      %481 = vmatprep.subr.bf16.mxu0 0
      %482 = vmatpush2.bf16.msra.mxu0 0
      %483 = vmatprep.subr.bf16.mxu0 0
      %484 = vmatpush2.bf16.msra.mxu0 0
      %485 = vmatprep.subr.bf16.mxu0 0
      %486 = vmatpush2.bf16.msra.mxu0 0
      %487 = vmatprep.subr.bf16.mxu0 0
      %488 = vmatpush2.bf16.msra.mxu0 0
      %489 = vmatprep.subr.bf16.mxu0 0
      %490 = vmatpush2.bf16.msra.mxu0 0
      %491 = vmatprep.subr.bf16.mxu0 0
      %492 = vmatpush2.bf16.msra.mxu0 0
      %493 = vmatprep.subr.bf16.mxu0 0
      %494 = vmatpush2.bf16.msra.mxu0 0
      %495 = vmatprep.mubr.bf16.mxu0 0
      %496 = vmatmul.mubr.bf16.gmra.mxu0 %v461
      %v497 = vpop.f32.mrf.mxu0
      %v498 = vadd.f32 %v457, %v497
      %v499 = vpop.f32.mrf.mxu0
      %v500 = vadd.f32 %v457, %v499
      %v501 = vpop.f32.mrf.mxu0
      %v502 = vpop.f32.mrf.mxu0
      %503 = vdwg.mxu0
      %v506 = vcombine.low %v498, %v500
      %508 = vst [vmem:[%s262] sm:$0xff] %v506
      %s509 = smul.u32 2, %s21
      %p510 = scmp.lt.s32.totalorder %s20, 1
      %s511 = scalar_select %p510, %s20, 1
      %p512 = scmp.lt.s32.totalorder %s509, 1
      %s513 = scalar_select %p512, %s509, 1
      %s514 = smul.addr %s511, 2
      %s515 = sadd.s32 %s513, %s514
      %s516 = smul.addr %s515, 4
      %s517 = scalar_lea.vmem %s5, %s516
      // Predicated region
      $region41: #{mlp_forward.1} parent=39 // pred_check
        %p518 = pneg %p160
      $region42: #{mlp_forward.1} parent=39 // pred_check_branch
        %520 = sbr.rel (%p518) target = $region44
      $region43: #{mlp_forward.1} parent=39 // pred_region
        %s521 = smul.u32 2, %s21
      $region44: #{mlp_forward.1} parent=39 // pred_fallthru
        _
    $region40: #{mlp_forward.1} parent=5 // pred_fallthru
      _
    %p522 = scmp.le.s32.totalorder 2, %s11
    // Predicated region
    $region45: #{mlp_forward.1} parent=5 // pred_check
      %p523 = pneg %p522
    $region46: #{mlp_forward.1} parent=5 // pred_check_branch
      %525 = sbr.rel (%p523) target = $region48
    $region47: #{mlp_forward.1} parent=5 // pred_region
      %s526 = ssub.s32 %s11, 2
      // Predicated region
      $region49: #{mlp_forward.1} parent=47 // pred_check
        %p527 = pneg %p166
      $region50: #{mlp_forward.1} parent=47 // pred_check_branch
        %529 = sbr.rel (%p527) target = $region52
      $region51: #{mlp_forward.1} parent=47 // pred_region
        %s530 = smul.u32 2, %s23
        %p531 = scmp.lt.s32.totalorder %s22, 1
        %s532 = scalar_select %p531, %s22, 1
        %p533 = scmp.lt.s32.totalorder %s530, 1
        %s534 = scalar_select %p533, %s530, 1
        %s535 = smul.addr %s532, 2
        %s536 = sadd.s32 %s534, %s535
        %s537 = smul.addr %s536, 4
        %s538 = scalar_lea.vmem %s5, %s537
      $region52: #{mlp_forward.1} parent=47 // pred_fallthru
        _
    $region48: #{mlp_forward.1} parent=5 // pred_fallthru
      _
  $region6: #{mlp_forward.1} parent=0 // loop_footer
    %s15 = sadd.s32 1, %s11
  $region7: #{mlp_forward.1} parent=0 // loop_footer_branch
    %10 = sbr.rel target = $region3
  $region8: #{mlp_forward.1} parent=0 // loop_exit
    _

</llo_original>
